<compile_context>
chip_gen: v7x
topology: tpu7x:2x2x1
jax: 0.10.0
libtpu: 0.0.40
codegen_flags: <defaults>
</compile_context>

<pallas_src>
import math

import jax
import jax.numpy as jnp
from jax import lax
from jax.experimental import pallas as pl
from jax.experimental.pallas import tpu as pltpu


def _round_up(x, m):
    return ((x + m - 1) // m) * m


def _nbytes(shape, dt):
    return int(math.prod(shape)) * jnp.dtype(dt).itemsize


def _disc_kernel(x_ref, w1_ref, s1_ref, c1_ref, w2_ref, s2_ref, c2_ref,
                 wh_ref, bh_ref, out_ref):
    """One (tm, *) batch tile of the full discriminator MLP.

    Matmul operands are bf16 (HBM/VMEM traffic halved), accumulation is f32 on the
    MXU.  BN(eval) + Linear bias are pre-folded into per-feature scale(s)/shift(c).
    The two heads are fused into a single lane-dense (tm, 128) output slab.
    """
    # --- layer 1: Linear -> BatchNorm1d(eval, folded) -> ReLU ---------------
    x = x_ref[...].astype(jnp.bfloat16)           # in-kernel cast, hidden under MXU
    h1 = jnp.dot(x, w1_ref[...], preferred_element_type=jnp.float32)
    h1 = jnp.maximum(h1 * s1_ref[...] + c1_ref[...], 0.0)
    # Dropout(0.5): identity at inference.
    # TODO(synk): training-mode dropout mask / BN batch statistics not implemented.
    h1 = h1.astype(jnp.bfloat16)

    # --- layer 2: Linear -> BatchNorm1d(eval, folded) -> ReLU ---------------
    h2 = jnp.dot(h1, w2_ref[...], preferred_element_type=jnp.float32)
    h2 = jnp.maximum(h2 * s2_ref[...] + c2_ref[...], 0.0)
    h2 = h2.astype(jnp.bfloat16)

    # --- fused heads: [ad_layer3 | ad_layer4] padded to 128 lanes ------------
    head = jnp.dot(h2, wh_ref[...], preferred_element_type=jnp.float32) + bh_ref[...]

    # sigmoid only on lane 0 (domain logit); other lanes keep raw class logits.
    # exp -> EUP, approximate reciprocal -> EUP (free slot vs. a VPU divide).
    sig = pl.reciprocal(1.0 + jnp.exp(-head), approx=True)
    col = lax.broadcasted_iota(jnp.int32, head.shape, dimension=1)
    out_ref[...] = jnp.where(col == 0, sig, head).astype(out_ref.dtype)


def _choose_tm(B):
    # >=2 grid steps when possible (megacore sharding on v7x), multiple of 16
    # (bf16 sublane packing), capped at 256 (good default on v5e/v6e/v7x).
    tm = _round_up(max(pl.cdiv(B, 2), 1), 16)
    return max(16, min(256, tm))


def gradient_discriminator_v2_forward(x, params, *, tm=None, interpret=False):
    """Fused forward of GradientDiscriminator_V2 (eval mode).

    x            : [B, in_feature] float32
    params["w1"] : [in_feature, hidden]   (Linear weights, math layout)
    params["w2"] : [hidden, hidden]
    params["w3"] : [hidden, 1]
    params["w4"] : [hidden, num_class]
    params["b*"] : biases
    params["bn{1,2}_*"] : BatchNorm1d gamma/beta/mean/var (running stats)
    returns      : (y [B,1], y_c [B,num_class]) float32
    """
    B, in_feature = x.shape
    hidden = params["w1"].shape[1]
    num_class = params["w4"].shape[1]
    eps = 1e-5

    # ---- fold BatchNorm(eval) + Linear bias into per-feature scale / shift ----
    s1 = (params["bn1_gamma"] / jnp.sqrt(params["bn1_var"] + eps)).astype(jnp.float32)
    c1 = ((params["b1"] - params["bn1_mean"]) * s1 + params["bn1_beta"]).astype(jnp.float32)
    s2 = (params["bn2_gamma"] / jnp.sqrt(params["bn2_var"] + eps)).astype(jnp.float32)
    c2 = ((params["b2"] - params["bn2_mean"]) * s2 + params["bn2_beta"]).astype(jnp.float32)

    # ---- fuse the two heads into one lane-dense [hidden, 128k] weight ----
    head_dim = 1 + num_class
    head_pad = _round_up(head_dim, 128)
    w_head = jnp.concatenate(
        [params["w3"].astype(jnp.float32), params["w4"].astype(jnp.float32)], axis=1)
    w_head = jnp.pad(w_head, ((0, 0), (0, head_pad - head_dim))).astype(jnp.bfloat16)
    b_head = jnp.concatenate(
        [params["b3"].astype(jnp.float32), params["b4"].astype(jnp.float32)])
    b_head = jnp.pad(b_head, (0, head_pad - head_dim)).reshape(1, head_pad)

    # ---- bf16 matmul weights (HBM/VMEM bytes halved), f32 vector params ----
    w1 = params["w1"].astype(jnp.bfloat16)
    w2 = params["w2"].astype(jnp.bfloat16)
    s1_2d = s1.reshape(1, hidden)
    c1_2d = c1.reshape(1, hidden)
    s2_2d = s2.reshape(1, hidden)
    c2_2d = c2.reshape(1, hidden)

    # ---- batch tiling: cdiv grid, Pallas handles the partial last block ----
    if tm is None:
        tm = _choose_tm(B)
    grid = (pl.cdiv(B, tm),)

    def row_map(i):        # batch-tiled arrays follow the grid
        return (i, 0)

    def const_map(i):      # weights: constant block index -> DMA'd from HBM once
        return (0, 0)

    in_specs = [
        pl.BlockSpec((tm, in_feature), row_map),
        pl.BlockSpec((in_feature, hidden), const_map),
        pl.BlockSpec((1, hidden), const_map),
        pl.BlockSpec((1, hidden), const_map),
        pl.BlockSpec((hidden, hidden), const_map),
        pl.BlockSpec((1, hidden), const_map),
        pl.BlockSpec((1, hidden), const_map),
        pl.BlockSpec((hidden, head_pad), const_map),
        pl.BlockSpec((1, head_pad), const_map),
    ]
    out_specs = pl.BlockSpec((tm, head_pad), row_map)
    out_shape = jax.ShapeDtypeStruct((B, head_pad), jnp.float32)

    # ---- explicit VMEM budget: double-buffered batch tiles + resident weights,
    # ---- capped at 7/8 of physical VMEM (≈56 MiB v7x, ≈112 MiB v5e/v6e).
    est = 2 * _nbytes((tm, in_feature), jnp.float32)            # x tile (dbl buf, f32)
    est += 2 * (_nbytes((in_feature, hidden), jnp.bfloat16)
                + _nbytes((hidden, hidden), jnp.bfloat16)
                + _nbytes((hidden, head_pad), jnp.bfloat16)
                + 4 * _nbytes((1, hidden), jnp.float32)
                + _nbytes((1, head_pad), jnp.float32))          # weights (pipeline bufs)
    est += 2 * _nbytes((tm, head_pad), jnp.float32)             # output tile (dbl buf)
    est += 4 * _nbytes((tm, hidden), jnp.float32)               # h1/h2/head headroom
    try:
        phys_vmem = int(pltpu.get_tpu_info().vmem_capacity_bytes)
    except Exception:
        phys_vmem = 64 * 1024 * 1024
    vmem_cap = (phys_vmem * 7) // 8
    vmem_limit = max(32 * 1024 * 1024, int(1.5 * est))
    vmem_limit = min(vmem_limit, vmem_cap)

    out = pl.pallas_call(
        _disc_kernel,
        out_shape=out_shape,
        grid_spec=pltpu.PrefetchScalarGridSpec(
            num_scalar_prefetch=0,
            grid=grid,
            in_specs=in_specs,
            out_specs=out_specs,
        ),
        compiler_params=pltpu.CompilerParams(
            dimension_semantics=("parallel",),      # batch tiles shard across TCs
            vmem_limit_bytes=vmem_limit,
        ),
        interpret=interpret,
    )(x, w1, s1_2d, c1_2d, w2, s2_2d, c2_2d, w_head, b_head)

    y = out[:, 0:1]
    y_c = out[:, 1:1 + num_class]
    return y, y_c


def forward_reference(x, params, *, bf16_matmul=False):
    """Plain-JAX reference mirroring the PyTorch eval-mode forward."""
    eps = 1e-5

    def mm(a, w):
        if bf16_matmul:
            a = a.astype(jnp.bfloat16)
            w = w.astype(jnp.bfloat16)
        return jnp.dot(a, w, preferred_element_type=jnp.float32)

    def bn(z, g, b, m, v):
        return (z - m) / jnp.sqrt(v + eps) * g + b

    h = mm(x, params["w1"]) + params["b1"]
    h = jax.nn.relu(bn(h, params["bn1_gamma"], params["bn1_beta"],
                       params["bn1_mean"], params["bn1_var"]))
    h = mm(h, params["w2"]) + params["b2"]
    h = jax.nn.relu(bn(h, params["bn2_gamma"], params["bn2_beta"],
                       params["bn2_mean"], params["bn2_var"]))
    y = jax.nn.sigmoid(mm(h, params["w3"]) + params["b3"])
    y_c = mm(h, params["w4"]) + params["b4"]
    return y, y_c


if __name__ == "__main__":
    # Small, deterministic configuration consistent with the module's typical use
    # (feature vector -> hidden -> {domain logit, class logits}).
    batch = 32
    in_feature = 256
    hidden_size = 256
    num_class = 16

    key = jax.random.PRNGKey(0)
    ks = jax.random.split(key, 12)

    def xavier(k, fan_in, fan_out):
        std = math.sqrt(2.0 / (fan_in + fan_out))
        return std * jax.random.normal(k, (fan_in, fan_out), dtype=jnp.float32)

    params = dict(
        w1=xavier(ks[0], in_feature, hidden_size),
        b1=jnp.zeros((hidden_size,), jnp.float32),
        w2=xavier(ks[1], hidden_size, hidden_size),
        b2=jnp.zeros((hidden_size,), jnp.float32),
        w3=xavier(ks[2], hidden_size, 1),
        b3=jnp.zeros((1,), jnp.float32),
        w4=xavier(ks[3], hidden_size, num_class),
        b4=jnp.zeros((num_class,), jnp.float32),
        bn1_gamma=1.0 + 0.02 * jax.random.normal(ks[4], (hidden_size,), jnp.float32),
        bn1_beta=jnp.zeros((hidden_size,), jnp.float32),
        bn1_mean=0.1 * jax.random.normal(ks[5], (hidden_size,), jnp.float32),
        bn1_var=1.0 + 0.1 * jnp.abs(jax.random.normal(ks[6], (hidden_size,), jnp.float32)),
        bn2_gamma=1.0 + 0.02 * jax.random.normal(ks[7], (hidden_size,), jnp.float32),
        bn2_beta=jnp.zeros((hidden_size,), jnp.float32),
        bn2_mean=0.1 * jax.random.normal(ks[8], (hidden_size,), jnp.float32),
        bn2_var=1.0 + 0.1 * jnp.abs(jax.random.normal(ks[9], (hidden_size,), jnp.float32)),
    )

    x = jax.random.normal(ks[10], (batch, in_feature), dtype=jnp.float32)

    y, y_c = gradient_discriminator_v2_forward(x, params)
    y = jax.block_until_ready(y)
    y_c = jax.block_until_ready(y_c)

    assert y.shape == (batch, 1)
    assert y_c.shape == (batch, num_class)

    # Tight check vs. a reference using the same bf16 matmul inputs / f32 accumulation.
    y_ref_bf, yc_ref_bf = forward_reference(x, params, bf16_matmul=True)
    assert jnp.allclose(y, y_ref_bf, rtol=1e-2, atol=1e-2)
    assert jnp.allclose(y_c, yc_ref_bf, rtol=1e-2, atol=1e-2)

    # Loose sanity check vs. the full-f32 reference (bf16 matmuls relax the tolerance).
    y_ref, yc_ref = forward_reference(x, params, bf16_matmul=False)
    assert jnp.allclose(y, y_ref, rtol=5e-2, atol=5e-2)
    assert jnp.allclose(y_c, yc_ref, rtol=5e-2, atol=5e-2)

    print("KERNEL_OK")
</pallas_src>

<mosaic_0001>
module attributes {stable_mosaic.version = 11 : i64} {
  func.func @_disc_kernel(%arg0: i32, %arg1: memref<16x256xf32, #tpu.memory_space<vmem>>, %arg2: memref<256x256xbf16, #tpu.memory_space<vmem>>, %arg3: memref<1x256xf32, #tpu.memory_space<vmem>>, %arg4: memref<1x256xf32, #tpu.memory_space<vmem>>, %arg5: memref<256x256xbf16, #tpu.memory_space<vmem>>, %arg6: memref<1x256xf32, #tpu.memory_space<vmem>>, %arg7: memref<1x256xf32, #tpu.memory_space<vmem>>, %arg8: memref<256x128xbf16, #tpu.memory_space<vmem>>, %arg9: memref<1x128xf32, #tpu.memory_space<vmem>>, %arg10: memref<16x128xf32, #tpu.memory_space<vmem>>) attributes {dimension_semantics = [#tpu.dimension_semantics<parallel>], iteration_bounds = array<i64: 2>, scalar_prefetch = 0 : i64, scratch_operands = 0 : i64, tpu.core_type = #tpu.core_type<tc>, window_params = [{transform_indices = @transform_0, window_bounds = array<i64: 16, 256>}, {pipeline_mode = #tpu.pipeline_mode<synchronous>, transform_indices = @transform_1, window_bounds = array<i64: 256, 256>}, {pipeline_mode = #tpu.pipeline_mode<synchronous>, transform_indices = @transform_2, window_bounds = array<i64: 1, 256>}, {pipeline_mode = #tpu.pipeline_mode<synchronous>, transform_indices = @transform_3, window_bounds = array<i64: 1, 256>}, {pipeline_mode = #tpu.pipeline_mode<synchronous>, transform_indices = @transform_4, window_bounds = array<i64: 256, 256>}, {pipeline_mode = #tpu.pipeline_mode<synchronous>, transform_indices = @transform_5, window_bounds = array<i64: 1, 256>}, {pipeline_mode = #tpu.pipeline_mode<synchronous>, transform_indices = @transform_6, window_bounds = array<i64: 1, 256>}, {pipeline_mode = #tpu.pipeline_mode<synchronous>, transform_indices = @transform_7, window_bounds = array<i64: 256, 128>}, {pipeline_mode = #tpu.pipeline_mode<synchronous>, transform_indices = @transform_8, window_bounds = array<i64: 1, 128>}, {transform_indices = @transform_9, window_bounds = array<i64: 16, 128>}]} {
    %c0 = arith.constant 0 : index
    %c0_0 = arith.constant 0 : index
    %0 = vector.load %arg1[%c0, %c0_0] : memref<16x256xf32, #tpu.memory_space<vmem>>, vector<16x256xf32>
    %1 = arith.truncf %0 : vector<16x256xf32> to vector<16x256xbf16>
    %c0_1 = arith.constant 0 : index
    %c0_2 = arith.constant 0 : index
    %2 = vector.load %arg2[%c0_1, %c0_2] : memref<256x256xbf16, #tpu.memory_space<vmem>>, vector<256x256xbf16>
    %cst = arith.constant dense<0.000000e+00> : vector<16x256xf32>
    %3 = tpu.matmul %1, %2, %cst {dimension_numbers = #tpu.dot_dimension_numbers<[1], [0], [0], [1], [0, 0, 1, 1], [], []>} : vector<16x256xbf16>, vector<256x256xbf16>, vector<16x256xf32> -> vector<16x256xf32>
    %c0_3 = arith.constant 0 : index
    %c0_4 = arith.constant 0 : index
    %4 = vector.load %arg3[%c0_3, %c0_4] : memref<1x256xf32, #tpu.memory_space<vmem>>, vector<1x256xf32>
    %5 = vector.broadcast %4 : vector<1x256xf32> to vector<16x256xf32>
    %6 = arith.mulf %3, %5 : vector<16x256xf32>
    %c0_5 = arith.constant 0 : index
    %c0_6 = arith.constant 0 : index
    %7 = vector.load %arg4[%c0_5, %c0_6] : memref<1x256xf32, #tpu.memory_space<vmem>>, vector<1x256xf32>
    %8 = vector.broadcast %7 : vector<1x256xf32> to vector<16x256xf32>
    %9 = arith.addf %6, %8 : vector<16x256xf32>
    %cst_7 = arith.constant 0.000000e+00 : f32
    %10 = vector.broadcast %cst_7 : f32 to vector<16x256xf32>
    %11 = arith.maximumf %9, %10 : vector<16x256xf32>
    %12 = arith.truncf %11 : vector<16x256xf32> to vector<16x256xbf16>
    %c0_8 = arith.constant 0 : index
    %c0_9 = arith.constant 0 : index
    %13 = vector.load %arg5[%c0_8, %c0_9] : memref<256x256xbf16, #tpu.memory_space<vmem>>, vector<256x256xbf16>
    %cst_10 = arith.constant dense<0.000000e+00> : vector<16x256xf32>
    %14 = tpu.matmul %12, %13, %cst_10 {dimension_numbers = #tpu.dot_dimension_numbers<[1], [0], [0], [1], [0, 0, 1, 1], [], []>} : vector<16x256xbf16>, vector<256x256xbf16>, vector<16x256xf32> -> vector<16x256xf32>
    %c0_11 = arith.constant 0 : index
    %c0_12 = arith.constant 0 : index
    %15 = vector.load %arg6[%c0_11, %c0_12] : memref<1x256xf32, #tpu.memory_space<vmem>>, vector<1x256xf32>
    %16 = vector.broadcast %15 : vector<1x256xf32> to vector<16x256xf32>
    %17 = arith.mulf %14, %16 : vector<16x256xf32>
    %c0_13 = arith.constant 0 : index
    %c0_14 = arith.constant 0 : index
    %18 = vector.load %arg7[%c0_13, %c0_14] : memref<1x256xf32, #tpu.memory_space<vmem>>, vector<1x256xf32>
    %19 = vector.broadcast %18 : vector<1x256xf32> to vector<16x256xf32>
    %20 = arith.addf %17, %19 : vector<16x256xf32>
    %cst_15 = arith.constant 0.000000e+00 : f32
    %21 = vector.broadcast %cst_15 : f32 to vector<16x256xf32>
    %22 = arith.maximumf %20, %21 : vector<16x256xf32>
    %23 = arith.truncf %22 : vector<16x256xf32> to vector<16x256xbf16>
    %c0_16 = arith.constant 0 : index
    %c0_17 = arith.constant 0 : index
    %24 = vector.load %arg8[%c0_16, %c0_17] : memref<256x128xbf16, #tpu.memory_space<vmem>>, vector<256x128xbf16>
    %cst_18 = arith.constant dense<0.000000e+00> : vector<16x128xf32>
    %25 = tpu.matmul %23, %24, %cst_18 {dimension_numbers = #tpu.dot_dimension_numbers<[1], [0], [0], [1], [0, 0, 1, 1], [], []>} : vector<16x256xbf16>, vector<256x128xbf16>, vector<16x128xf32> -> vector<16x128xf32>
    %c0_19 = arith.constant 0 : index
    %c0_20 = arith.constant 0 : index
    %26 = vector.load %arg9[%c0_19, %c0_20] : memref<1x128xf32, #tpu.memory_space<vmem>>, vector<1x128xf32>
    %27 = vector.broadcast %26 : vector<1x128xf32> to vector<16x128xf32>
    %28 = arith.addf %25, %27 : vector<16x128xf32>
    %cst_21 = arith.constant 0.000000e+00 : f32
    %29 = vector.broadcast %cst_21 : f32 to vector<16x128xf32>
    %30 = arith.subf %29, %28 : vector<16x128xf32>
    %31 = math.exp %30 : vector<16x128xf32>
    %cst_22 = arith.constant 1.000000e+00 : f32
    %32 = vector.broadcast %cst_22 : f32 to vector<16x128xf32>
    %33 = arith.addf %32, %31 : vector<16x128xf32>
    %34 = tpu.reciprocal %33 {approx = true} : vector<16x128xf32> -> vector<16x128xf32>
    %35 = tpu.iota {dimensions = array<i32: 1>} : vector<16x128xi32>
    %c0_i32 = arith.constant 0 : i32
    %36 = vector.broadcast %c0_i32 : i32 to vector<16x128xi32>
    %37 = arith.cmpi eq, %35, %36 : vector<16x128xi32>
    %38 = arith.select %37, %34, %28 : vector<16x128xi1>, vector<16x128xf32>
    %c0_23 = arith.constant 0 : index
    %c0_24 = arith.constant 0 : index
    %39 = vector.load %arg10[%c0_23, %c0_24] : memref<16x128xf32, #tpu.memory_space<vmem>>, vector<16x128xf32>
    tpu.vector_store %arg10[%c0_23, %c0_24], %38 {strides = array<i32>} : memref<16x128xf32, #tpu.memory_space<vmem>>, vector<16x128xf32>,
    return
  }
  func.func @transform_0(%arg0: i32) -> (i32, i32) {
    %c0_i32 = arith.constant 0 : i32
    %c0_i32_0 = arith.constant 0 : i32
    return %arg0, %c0_i32 : i32, i32
  }
  func.func @transform_1(%arg0: i32) -> (i32, i32) {
    %c0_i32 = arith.constant 0 : i32
    %c0_i32_0 = arith.constant 0 : i32
    %c0_i32_1 = arith.constant 0 : i32
    return %c0_i32, %c0_i32_0 : i32, i32
  }
  func.func @transform_2(%arg0: i32) -> (i32, i32) {
    %c0_i32 = arith.constant 0 : i32
    %c0_i32_0 = arith.constant 0 : i32
    %c0_i32_1 = arith.constant 0 : i32
    return %c0_i32, %c0_i32_0 : i32, i32
  }
  func.func @transform_3(%arg0: i32) -> (i32, i32) {
    %c0_i32 = arith.constant 0 : i32
    %c0_i32_0 = arith.constant 0 : i32
    %c0_i32_1 = arith.constant 0 : i32
    return %c0_i32, %c0_i32_0 : i32, i32
  }
  func.func @transform_4(%arg0: i32) -> (i32, i32) {
    %c0_i32 = arith.constant 0 : i32
    %c0_i32_0 = arith.constant 0 : i32
    %c0_i32_1 = arith.constant 0 : i32
    return %c0_i32, %c0_i32_0 : i32, i32
  }
  func.func @transform_5(%arg0: i32) -> (i32, i32) {
    %c0_i32 = arith.constant 0 : i32
    %c0_i32_0 = arith.constant 0 : i32
    %c0_i32_1 = arith.constant 0 : i32
    return %c0_i32, %c0_i32_0 : i32, i32
  }
  func.func @transform_6(%arg0: i32) -> (i32, i32) {
    %c0_i32 = arith.constant 0 : i32
    %c0_i32_0 = arith.constant 0 : i32
    %c0_i32_1 = arith.constant 0 : i32
    return %c0_i32, %c0_i32_0 : i32, i32
  }
  func.func @transform_7(%arg0: i32) -> (i32, i32) {
    %c0_i32 = arith.constant 0 : i32
    %c0_i32_0 = arith.constant 0 : i32
    %c0_i32_1 = arith.constant 0 : i32
    return %c0_i32, %c0_i32_0 : i32, i32
  }
  func.func @transform_8(%arg0: i32) -> (i32, i32) {
    %c0_i32 = arith.constant 0 : i32
    %c0_i32_0 = arith.constant 0 : i32
    %c0_i32_1 = arith.constant 0 : i32
    return %c0_i32, %c0_i32_0 : i32, i32
  }
  func.func @transform_9(%arg0: i32) -> (i32, i32) {
    %c0_i32 = arith.constant 0 : i32
    %c0_i32_0 = arith.constant 0 : i32
    return %arg0, %c0_i32 : i32, i32
  }
}

</mosaic_0001>

<llo_original>
// kernel: tpu_custom_call.1
$region0: #{tpu_custom_call.1}
  #allocation0 [shape = 'u32[]', space=smem, size = 0x4, offset = 0x4, fixed_abs, tag = 'smem constant byte address 0x4 - core index']
  #allocation1 [shape = 'u32[144,128]{1,0:T(1,128)}', space=vmem, size = 0x12000, scoped, tag = 'internal scratch']
  %s0 = inlined_call_operand.hbm [shape: f32[32,256], index: 0, kind: input, shape index: {}]
  %s1 = inlined_call_operand.hbm [shape: bf16[256,256], index: 1, kind: input, shape index: {}]
  %s2 = inlined_call_operand.vmem [shape: f32[1,256], index: 2, kind: input, shape index: {}]
  %s3 = inlined_call_operand.vmem [shape: f32[1,256], index: 3, kind: input, shape index: {}]
  %s4 = inlined_call_operand.hbm [shape: bf16[256,256], index: 4, kind: input, shape index: {}]
  %s5 = inlined_call_operand.vmem [shape: f32[1,256], index: 5, kind: input, shape index: {}]
  %s6 = inlined_call_operand.vmem [shape: f32[1,256], index: 6, kind: input, shape index: {}]
  %s7 = inlined_call_operand.hbm [shape: bf16[256,128], index: 7, kind: input, shape index: {}]
  %s8 = inlined_call_operand.vmem [shape: f32[1,128], index: 8, kind: input, shape index: {}]
  %s9 = inlined_call_operand.hbm [shape: f32[32,128], index: 9, kind: output, shape index: {}]
  %s10 = sld [smem:[#allocation0]]
  $region85: #{tpu_custom_call.1} parent=0
    _
  %s12 = ssub.s32 1, %s10
  %s13 = scalar_select 0, %s12, %s10
  $region1: #{tpu_custom_call.1} parent=0
    #allocation2 [shape = 'u8[32768]{0}', space=vmem, size = 0x8000, scoped, tag = 'input window, operand 0']
    #allocation3 [shape = 's32[2]{0}', space=sflag, size = 0x8, scoped, tag = 'scoped memory for tpu_custom_call.1']
    #allocation4 [shape = 's32[2]{0}', space=sflag, size = 0x8, scoped, tag = 'scoped memory for tpu_custom_call.1']
    #allocation5 [shape = 'u8[131072]{0}', space=vmem, size = 0x20000, scoped, tag = 'input window, operand 1, single buffered']
    #allocation6 [shape = 's32[1]{0}', space=sflag, size = 0x4, scoped, tag = 'scoped memory for tpu_custom_call.1']
    #allocation7 [shape = 'u8[131072]{0}', space=vmem, size = 0x20000, scoped, tag = 'input window, operand 4, single buffered']
    #allocation8 [shape = 'u8[65536]{0}', space=vmem, size = 0x10000, scoped, tag = 'input window, operand 7, single buffered']
    #allocation9 [shape = 's32[1]{0}', space=sflag, size = 0x4, scoped, tag = 'scoped memory for tpu_custom_call.1']
    #allocation10 [shape = 'u8[16384]{0}', space=vmem, size = 0x4000, scoped, tag = 'output window, operand 0']
    %14 = vsyncpa [#allocation3], 0
    %s15 = scalar_lea.sflag [#allocation3], 1
    %16 = vsyncpa %s15, 0
    %17 = vsyncpa [#allocation6], 0
    %18 = vsyncpa [#allocation9], 0
    %19 = vsyncpa [#allocation4], 0
    %s20 = scalar_lea.sflag [#allocation4], 1
    %21 = vsyncpa %s20, 0
    loop: start=0, step=1, limit=4
    $region2: #{tpu_custom_call.1} parent=1 // loop_pre_header
      _
    $region3: #{tpu_custom_call.1} parent=1 // loop_header
      %s23 = sphi 0, %s27
      %p24 = scmp.ge.s32.totalorder %s23, 4
      %s33 = sphi 0, %s35
      %s36 = sphi 0, %s33
      %s37 = sphi 0, %s36
      %s53 = sphi 0, %s37
      %s57 = sphi 0, %s57
      %s59 = sphi 0, %s57
      %s60 = sphi 0, %s59
      %s74 = sphi 0, %s60
      %s78 = sphi 0, %s78
      %s80 = sphi 0, %s78
      %s81 = sphi 0, %s80
      %s95 = sphi 0, %s81
      %s99 = sphi 0, %s99
      %s101 = sphi 0, %s99
      %s102 = sphi 0, %s101
      %s116 = sphi 0, %s102
      %s120 = sphi 0, %s120
      %s122 = sphi 0, %s120
      %s123 = sphi 0, %s122
      %s137 = sphi 0, %s123
      %s141 = sphi 0, %s141
      %s143 = sphi 0, %s141
      %s144 = sphi 0, %s143
      %s158 = sphi 0, %s144
      %s162 = sphi 0, %s162
      %s164 = sphi 0, %s162
      %s165 = sphi 0, %s164
      %s179 = sphi 0, %s165
      %s183 = sphi 0, %s183
      %s185 = sphi 0, %s183
      %s186 = sphi 0, %s185
      %s200 = sphi 0, %s186
      %s204 = sphi 0, %s204
      %s206 = sphi 0, %s204
      %s207 = sphi 0, %s206
      %s221 = sphi 0, %s207
      %s227 = sphi 0, %s229
      %s230 = sphi 0, %s227
      %s231 = sphi 0, %s230
      %s247 = sphi 0, %s231
    $region4: #{tpu_custom_call.1} parent=1 // loop_header_branch
      %26 = sbr.rel (%p24) target = $region8
    $region5: #{tpu_custom_call.1} parent=1 // loop_body
      %s28 = ssub.s32 %s23, 1
      %s29 = ssub.s32 %s23, 2
      %s30 = sadd.s32 %s23, 1
      %s31 = ssub.s32 %s23, %s30
      %p32 = scmp.eq.s32.totalorder %s31, 0
      %s34 = sadd.s32 %s33, 1
      %s35 = scalar_select %p32, %s33, %s34
      %p38 = pneg %p32
      %p39 = scmp.eq.s32.totalorder %s23, 1
      %p40 = por %p38, %p39
      %p41 = scmp.ne.s32.totalorder %s33, %s36
      %p42 = scmp.eq.s32.totalorder %s23, 0
      %p43 = por %p41, %p42
      %p44 = scmp.ne.s32.totalorder %s33, %s36
      %p45 = scmp.eq.s32.totalorder %s28, 1
      %p46 = por %p44, %p45
      %p47 = scmp.ne.s32.totalorder %s36, %s37
      %p48 = scmp.eq.s32.totalorder %s28, 0
      %p49 = por %p47, %p48
      %p50 = scmp.ne.s32.totalorder %s36, %s37
      %p51 = scmp.eq.s32.totalorder %s29, 1
      %p52 = por %p50, %p51
      %p54 = scmp.ne.s32.totalorder %s37, %s53
      %p55 = scmp.eq.s32.totalorder %s29, 0
      %p56 = por %p54, %p55
      %s58 = sadd.s32 %s57, 1
      %p61 = scmp.eq.s32.totalorder %s23, 1
      %p62 = scmp.ne.s32.totalorder %s57, %s59
      %p63 = scmp.eq.s32.totalorder %s23, 0
      %p64 = por %p62, %p63
      %p65 = scmp.ne.s32.totalorder %s57, %s59
      %p66 = scmp.eq.s32.totalorder %s28, 1
      %p67 = por %p65, %p66
      %p68 = scmp.ne.s32.totalorder %s59, %s60
      %p69 = scmp.eq.s32.totalorder %s28, 0
      %p70 = por %p68, %p69
      %p71 = scmp.ne.s32.totalorder %s59, %s60
      %p72 = scmp.eq.s32.totalorder %s29, 1
      %p73 = por %p71, %p72
      %p75 = scmp.ne.s32.totalorder %s60, %s74
      %p76 = scmp.eq.s32.totalorder %s29, 0
      %p77 = por %p75, %p76
      %s79 = sadd.s32 %s78, 1
      %p82 = scmp.eq.s32.totalorder %s23, 1
      %p83 = scmp.ne.s32.totalorder %s78, %s80
      %p84 = scmp.eq.s32.totalorder %s23, 0
      %p85 = por %p83, %p84
      %p86 = scmp.ne.s32.totalorder %s78, %s80
      %p87 = scmp.eq.s32.totalorder %s28, 1
      %p88 = por %p86, %p87
      %p89 = scmp.ne.s32.totalorder %s80, %s81
      %p90 = scmp.eq.s32.totalorder %s28, 0
      %p91 = por %p89, %p90
      %p92 = scmp.ne.s32.totalorder %s80, %s81
      %p93 = scmp.eq.s32.totalorder %s29, 1
      %p94 = por %p92, %p93
      %p96 = scmp.ne.s32.totalorder %s81, %s95
      %p97 = scmp.eq.s32.totalorder %s29, 0
      %p98 = por %p96, %p97
      %s100 = sadd.s32 %s99, 1
      %p103 = scmp.eq.s32.totalorder %s23, 1
      %p104 = scmp.ne.s32.totalorder %s99, %s101
      %p105 = scmp.eq.s32.totalorder %s23, 0
      %p106 = por %p104, %p105
      %p107 = scmp.ne.s32.totalorder %s99, %s101
      %p108 = scmp.eq.s32.totalorder %s28, 1
      %p109 = por %p107, %p108
      %p110 = scmp.ne.s32.totalorder %s101, %s102
      %p111 = scmp.eq.s32.totalorder %s28, 0
      %p112 = por %p110, %p111
      %p113 = scmp.ne.s32.totalorder %s101, %s102
      %p114 = scmp.eq.s32.totalorder %s29, 1
      %p115 = por %p113, %p114
      %p117 = scmp.ne.s32.totalorder %s102, %s116
      %p118 = scmp.eq.s32.totalorder %s29, 0
      %p119 = por %p117, %p118
      %s121 = sadd.s32 %s120, 1
      %p124 = scmp.eq.s32.totalorder %s23, 1
      %p125 = scmp.ne.s32.totalorder %s120, %s122
      %p126 = scmp.eq.s32.totalorder %s23, 0
      %p127 = por %p125, %p126
      %p128 = scmp.ne.s32.totalorder %s120, %s122
      %p129 = scmp.eq.s32.totalorder %s28, 1
      %p130 = por %p128, %p129
      %p131 = scmp.ne.s32.totalorder %s122, %s123
      %p132 = scmp.eq.s32.totalorder %s28, 0
      %p133 = por %p131, %p132
      %p134 = scmp.ne.s32.totalorder %s122, %s123
      %p135 = scmp.eq.s32.totalorder %s29, 1
      %p136 = por %p134, %p135
      %p138 = scmp.ne.s32.totalorder %s123, %s137
      %p139 = scmp.eq.s32.totalorder %s29, 0
      %p140 = por %p138, %p139
      %s142 = sadd.s32 %s141, 1
      %p145 = scmp.eq.s32.totalorder %s23, 1
      %p146 = scmp.ne.s32.totalorder %s141, %s143
      %p147 = scmp.eq.s32.totalorder %s23, 0
      %p148 = por %p146, %p147
      %p149 = scmp.ne.s32.totalorder %s141, %s143
      %p150 = scmp.eq.s32.totalorder %s28, 1
      %p151 = por %p149, %p150
      %p152 = scmp.ne.s32.totalorder %s143, %s144
      %p153 = scmp.eq.s32.totalorder %s28, 0
      %p154 = por %p152, %p153
      %p155 = scmp.ne.s32.totalorder %s143, %s144
      %p156 = scmp.eq.s32.totalorder %s29, 1
      %p157 = por %p155, %p156
      %p159 = scmp.ne.s32.totalorder %s144, %s158
      %p160 = scmp.eq.s32.totalorder %s29, 0
      %p161 = por %p159, %p160
      %s163 = sadd.s32 %s162, 1
      %p166 = scmp.eq.s32.totalorder %s23, 1
      %p167 = scmp.ne.s32.totalorder %s162, %s164
      %p168 = scmp.eq.s32.totalorder %s23, 0
      %p169 = por %p167, %p168
      %p170 = scmp.ne.s32.totalorder %s162, %s164
      %p171 = scmp.eq.s32.totalorder %s28, 1
      %p172 = por %p170, %p171
      %p173 = scmp.ne.s32.totalorder %s164, %s165
      %p174 = scmp.eq.s32.totalorder %s28, 0
      %p175 = por %p173, %p174
      %p176 = scmp.ne.s32.totalorder %s164, %s165
      %p177 = scmp.eq.s32.totalorder %s29, 1
      %p178 = por %p176, %p177
      %p180 = scmp.ne.s32.totalorder %s165, %s179
      %p181 = scmp.eq.s32.totalorder %s29, 0
      %p182 = por %p180, %p181
      %s184 = sadd.s32 %s183, 1
      %p187 = scmp.eq.s32.totalorder %s23, 1
      %p188 = scmp.ne.s32.totalorder %s183, %s185
      %p189 = scmp.eq.s32.totalorder %s23, 0
      %p190 = por %p188, %p189
      %p191 = scmp.ne.s32.totalorder %s183, %s185
      %p192 = scmp.eq.s32.totalorder %s28, 1
      %p193 = por %p191, %p192
      %p194 = scmp.ne.s32.totalorder %s185, %s186
      %p195 = scmp.eq.s32.totalorder %s28, 0
      %p196 = por %p194, %p195
      %p197 = scmp.ne.s32.totalorder %s185, %s186
      %p198 = scmp.eq.s32.totalorder %s29, 1
      %p199 = por %p197, %p198
      %p201 = scmp.ne.s32.totalorder %s186, %s200
      %p202 = scmp.eq.s32.totalorder %s29, 0
      %p203 = por %p201, %p202
      %s205 = sadd.s32 %s204, 1
      %p208 = scmp.eq.s32.totalorder %s23, 1
      %p209 = scmp.ne.s32.totalorder %s204, %s206
      %p210 = scmp.eq.s32.totalorder %s23, 0
      %p211 = por %p209, %p210
      %p212 = scmp.ne.s32.totalorder %s204, %s206
      %p213 = scmp.eq.s32.totalorder %s28, 1
      %p214 = por %p212, %p213
      %p215 = scmp.ne.s32.totalorder %s206, %s207
      %p216 = scmp.eq.s32.totalorder %s28, 0
      %p217 = por %p215, %p216
      %p218 = scmp.ne.s32.totalorder %s206, %s207
      %p219 = scmp.eq.s32.totalorder %s29, 1
      %p220 = por %p218, %p219
      %p222 = scmp.ne.s32.totalorder %s207, %s221
      %p223 = scmp.eq.s32.totalorder %s29, 0
      %p224 = por %p222, %p223
      %s225 = ssub.s32 %s23, %s30
      %p226 = scmp.eq.s32.totalorder %s225, 0
      %s228 = sadd.s32 %s227, 1
      %s229 = scalar_select %p226, %s227, %s228
      %p232 = pneg %p226
      %p233 = scmp.eq.s32.totalorder %s23, 1
      %p234 = por %p232, %p233
      %p235 = scmp.ne.s32.totalorder %s227, %s230
      %p236 = scmp.eq.s32.totalorder %s23, 0
      %p237 = por %p235, %p236
      %p238 = scmp.ne.s32.totalorder %s227, %s230
      %p239 = scmp.eq.s32.totalorder %s28, 1
      %p240 = por %p238, %p239
      %p241 = scmp.ne.s32.totalorder %s230, %s231
      %p242 = scmp.eq.s32.totalorder %s28, 0
      %p243 = por %p241, %p242
      %p244 = scmp.ne.s32.totalorder %s230, %s231
      %p245 = scmp.eq.s32.totalorder %s29, 1
      %p246 = por %p244, %p245
      %p248 = scmp.ne.s32.totalorder %s231, %s247
      %p249 = scmp.eq.s32.totalorder %s29, 0
      %p250 = por %p248, %p249
      %p251 = scmp.le.s32.totalorder 1, %s23
      %p252 = scmp.lt.s32.totalorder %s23, 3
      %p253 = pnand %p251, %p252
      %p254 = pneg %p253
      // Predicated region
      $region9: #{tpu_custom_call.1} parent=5 // pred_check
        _
      $region10: #{tpu_custom_call.1} parent=5 // pred_check_branch
        %256 = sbr.rel (%p253) target = $region12
      $region11: #{tpu_custom_call.1} parent=5 // pred_region
        %s257 = ssub.s32 %s23, 1
        // Predicated region
        $region13: #{tpu_custom_call.1} parent=11 // pred_check
          %p258 = pneg %p70
        $region14: #{tpu_custom_call.1} parent=11 // pred_check_branch
          %260 = sbr.rel (%p258) target = $region16
        $region15: #{tpu_custom_call.1} parent=11 // pred_region
          %s262 = ssub.s32 4096, 4096
          %263 = vsyncadd [#allocation6], %s262
          %s264 = sshll.u32 [#allocation5], 4
          %s265 = int_to_ptr.vmem [resolvable:$true] %s264
          %270 = dma.hbm_to_vmem [thread:$0]  %s1, 4096, %s265, [#allocation6], 128, 128, 8
        $region16: #{tpu_custom_call.1} parent=11 // pred_fallthru
          _
        // Predicated region
        $region17: #{tpu_custom_call.1} parent=11 // pred_check
          %p271 = pneg %p91
        $region18: #{tpu_custom_call.1} parent=11 // pred_check_branch
          %273 = sbr.rel (%p271) target = $region20
        $region19: #{tpu_custom_call.1} parent=11 // pred_region
          _
        $region20: #{tpu_custom_call.1} parent=11 // pred_fallthru
          _
        // Predicated region
        $region21: #{tpu_custom_call.1} parent=11 // pred_check
          %p274 = pneg %p112
        $region22: #{tpu_custom_call.1} parent=11 // pred_check_branch
          %276 = sbr.rel (%p274) target = $region24
        $region23: #{tpu_custom_call.1} parent=11 // pred_region
          _
        $region24: #{tpu_custom_call.1} parent=11 // pred_fallthru
          _
        // Predicated region
        $region25: #{tpu_custom_call.1} parent=11 // pred_check
          %p277 = pneg %p133
        $region26: #{tpu_custom_call.1} parent=11 // pred_check_branch
          %279 = sbr.rel (%p277) target = $region28
        $region27: #{tpu_custom_call.1} parent=11 // pred_region
          %s281 = ssub.s32 4096, 4096
          %282 = vsyncadd [#allocation6], %s281
          %s283 = sshll.u32 [#allocation7], 4
          %s284 = int_to_ptr.vmem [resolvable:$true] %s283
          %289 = dma.hbm_to_vmem [thread:$0]  %s4, 4096, %s284, [#allocation6], 128, 128, 8
        $region28: #{tpu_custom_call.1} parent=11 // pred_fallthru
          _
        // Predicated region
        $region29: #{tpu_custom_call.1} parent=11 // pred_check
          %p290 = pneg %p154
        $region30: #{tpu_custom_call.1} parent=11 // pred_check_branch
          %292 = sbr.rel (%p290) target = $region32
        $region31: #{tpu_custom_call.1} parent=11 // pred_region
          _
        $region32: #{tpu_custom_call.1} parent=11 // pred_fallthru
          _
        // Predicated region
        $region33: #{tpu_custom_call.1} parent=11 // pred_check
          %p293 = pneg %p175
        $region34: #{tpu_custom_call.1} parent=11 // pred_check_branch
          %295 = sbr.rel (%p293) target = $region36
        $region35: #{tpu_custom_call.1} parent=11 // pred_region
          _
        $region36: #{tpu_custom_call.1} parent=11 // pred_fallthru
          _
        // Predicated region
        $region37: #{tpu_custom_call.1} parent=11 // pred_check
          %p296 = pneg %p196
        $region38: #{tpu_custom_call.1} parent=11 // pred_check_branch
          %298 = sbr.rel (%p296) target = $region40
        $region39: #{tpu_custom_call.1} parent=11 // pred_region
          %s300 = ssub.s32 2048, 2048
          %301 = vsyncadd [#allocation9], %s300
          %s302 = sshll.u32 [#allocation8], 4
          %s303 = int_to_ptr.vmem [resolvable:$true] %s302
          %308 = dma.hbm_to_vmem [thread:$0]  %s7, 2048, %s303, [#allocation9], 64, 64, 4
        $region40: #{tpu_custom_call.1} parent=11 // pred_fallthru
          _
        // Predicated region
        $region41: #{tpu_custom_call.1} parent=11 // pred_check
          %p309 = pneg %p217
        $region42: #{tpu_custom_call.1} parent=11 // pred_check_branch
          %311 = sbr.rel (%p309) target = $region44
        $region43: #{tpu_custom_call.1} parent=11 // pred_region
          _
        $region44: #{tpu_custom_call.1} parent=11 // pred_fallthru
          _
      $region12: #{tpu_custom_call.1} parent=5 // pred_fallthru
        _
      %p312 = scmp.lt.s32.totalorder %s23, 2
      // Predicated region
      $region45: #{tpu_custom_call.1} parent=5 // pred_check
        %p313 = pneg %p312
      $region46: #{tpu_custom_call.1} parent=5 // pred_check_branch
        %315 = sbr.rel (%p313) target = $region48
      $region47: #{tpu_custom_call.1} parent=5 // pred_region
        // Predicated region
        $region49: #{tpu_custom_call.1} parent=47 // pred_check
          %p316 = pneg %p43
        $region50: #{tpu_custom_call.1} parent=47 // pred_check_branch
          %318 = sbr.rel (%p316) target = $region52
        $region51: #{tpu_custom_call.1} parent=47 // pred_region
          %s319 = sand.u32 %s33, 1
          %s320 = scalar_lea.sflag [#allocation3], %s319
          %s321 = sand.u32 %s33, 1
          %s322 = smul.addr %s321, 32
          %s323 = scalar_lea.vmem [#allocation2], %s322
          %s324 = smul.u32 2, %s23
          %s326 = ssub.s32 512, 512
          %327 = vsyncadd %s320, %s326
          %s328 = smul.addr %s324, 2
          %s329 = smul.addr %s328, 128
          %s330 = scalar_lea.hbm %s0, %s329
          %s331 = sshll.u32 %s323, 4
          %s332 = int_to_ptr.vmem [resolvable:$true] %s331
          %337 = dma.hbm_to_vmem [thread:$0]  %s330, 512, %s332, %s320, 256, 256, 16
        $region52: #{tpu_custom_call.1} parent=47 // pred_fallthru
          _
      $region48: #{tpu_custom_call.1} parent=5 // pred_fallthru
        _
      %p338 = scmp.le.s32.totalorder 1, %s23
      %p339 = scmp.lt.s32.totalorder %s23, 3
      %p340 = pnand %p338, %p339
      %p341 = pneg %p340
      // Predicated region
      $region53: #{tpu_custom_call.1} parent=5 // pred_check
        _
      $region54: #{tpu_custom_call.1} parent=5 // pred_check_branch
        %343 = sbr.rel (%p340) target = $region56
      $region55: #{tpu_custom_call.1} parent=5 // pred_region
        %s344 = ssub.s32 %s23, 1
        %s345 = sand.u32 %s36, 1
        %s346 = scalar_lea.sflag [#allocation3], %s345
        %s347 = sand.u32 %s36, 1
        %s348 = smul.addr %s347, 32
        %s349 = scalar_lea.vmem [#allocation2], %s348
        // Predicated region
        $region57: #{tpu_custom_call.1} parent=55 // pred_check
          %p350 = pneg %p49
        $region58: #{tpu_custom_call.1} parent=55 // pred_check_branch
          %352 = sbr.rel (%p350) target = $region60
        $region59: #{tpu_custom_call.1} parent=55 // pred_region
          %353 = dma.done %s346, 512
        $region60: #{tpu_custom_call.1} parent=55 // pred_fallthru
          _
        // Predicated region
        $region61: #{tpu_custom_call.1} parent=55 // pred_check
          %p354 = pneg %p70
        $region62: #{tpu_custom_call.1} parent=55 // pred_check_branch
          %356 = sbr.rel (%p354) target = $region64
        $region63: #{tpu_custom_call.1} parent=55 // pred_region
          %357 = dma.done [#allocation6], 4096
        $region64: #{tpu_custom_call.1} parent=55 // pred_fallthru
          _
        // Predicated region
        $region65: #{tpu_custom_call.1} parent=55 // pred_check
          %p358 = pneg %p133
        $region66: #{tpu_custom_call.1} parent=55 // pred_check_branch
          %360 = sbr.rel (%p358) target = $region68
        $region67: #{tpu_custom_call.1} parent=55 // pred_region
          %361 = dma.done [#allocation6], 4096
        $region68: #{tpu_custom_call.1} parent=55 // pred_fallthru
          _
        // Predicated region
        $region69: #{tpu_custom_call.1} parent=55 // pred_check
          %p362 = pneg %p196
        $region70: #{tpu_custom_call.1} parent=55 // pred_check_branch
          %364 = sbr.rel (%p362) target = $region72
        $region71: #{tpu_custom_call.1} parent=55 // pred_region
          %365 = dma.done [#allocation9], 2048
        $region72: #{tpu_custom_call.1} parent=55 // pred_fallthru
          _
        %s366 = sand.u32 %s36, 1
        %s367 = scalar_lea.sflag [#allocation3], %s366
        %s368 = sand.u32 %s36, 1
        %s369 = smul.addr %s368, 32
        %s370 = scalar_lea.vmem [#allocation2], %s369
        %p371 = pneg %p49
        %p372 = pneg %p46
        %p373 = pneg %p70
        %p374 = pneg %p67
        %p375 = pneg %p91
        %p376 = pneg %p88
        %p377 = pneg %p112
        %p378 = pneg %p109
        %p379 = pneg %p133
        %p380 = pneg %p130
        %p381 = pneg %p154
        %p382 = pneg %p151
        %p383 = pneg %p175
        %p384 = pneg %p172
        %p385 = pneg %p196
        %p386 = pneg %p193
        %p387 = pneg %p217
        %p388 = pneg %p214
        %p389 = pneg %p243
        %p390 = pneg %p240
        %s391 = sand.u32 %s230, 1
        %s392 = scalar_lea.sflag [#allocation4], %s391
        %s393 = sand.u32 %s230, 1
        %s394 = smul.addr %s393, 16
        %s395 = scalar_lea.vmem [#allocation10], %s394
        %s396 = smul.u32 2, %s28
        %s397 = smul.u32 2, %s28
        %v399 = vld [vmem:[%s349] sm:$0xff]
        %v400 = vld [vmem:[%s349 + $0x8] sm:$0xff]
        %v401 = vld [vmem:[%s349 + $0x10] sm:$0xff]
        %v402 = vld [vmem:[%s349 + $0x18] sm:$0xff]
        %v403 = vpack.c.bf16 %v401, %v399
        %v404 = vpack.c.bf16 %v402, %v400
        %v405 = vld [vmem:[#allocation5] sm:$0xff]
        %v406 = vld [vmem:[#allocation5 + $0x8] sm:$0xff]
        %v407 = vld [vmem:[#allocation5 + $0x10] sm:$0xff]
        %v408 = vld [vmem:[#allocation5 + $0x18] sm:$0xff]
        %v409 = vld [vmem:[#allocation5 + $0x20] sm:$0xff]
        %v410 = vld [vmem:[#allocation5 + $0x28] sm:$0xff]
        %v411 = vld [vmem:[#allocation5 + $0x30] sm:$0xff]
        %v412 = vld [vmem:[#allocation5 + $0x38] sm:$0xff]
        %v413 = vld [vmem:[#allocation5 + $0x40] sm:$0xff]
        %v414 = vld [vmem:[#allocation5 + $0x48] sm:$0xff]
        %v415 = vld [vmem:[#allocation5 + $0x50] sm:$0xff]
        %v416 = vld [vmem:[#allocation5 + $0x58] sm:$0xff]
        %v417 = vld [vmem:[#allocation5 + $0x60] sm:$0xff]
        %v418 = vld [vmem:[#allocation5 + $0x68] sm:$0xff]
        %v419 = vld [vmem:[#allocation5 + $0x70] sm:$0xff]
        %v420 = vld [vmem:[#allocation5 + $0x78] sm:$0xff]
        %v421 = vld [vmem:[#allocation5 + $0x80] sm:$0xff]
        %v422 = vld [vmem:[#allocation5 + $0x88] sm:$0xff]
        %v423 = vld [vmem:[#allocation5 + $0x90] sm:$0xff]
        %v424 = vld [vmem:[#allocation5 + $0x98] sm:$0xff]
        %v425 = vld [vmem:[#allocation5 + $0xa0] sm:$0xff]
        %v426 = vld [vmem:[#allocation5 + $0xa8] sm:$0xff]
        %v427 = vld [vmem:[#allocation5 + $0xb0] sm:$0xff]
        %v428 = vld [vmem:[#allocation5 + $0xb8] sm:$0xff]
        %v429 = vld [vmem:[#allocation5 + $0xc0] sm:$0xff]
        %v430 = vld [vmem:[#allocation5 + $0xc8] sm:$0xff]
        %v431 = vld [vmem:[#allocation5 + $0xd0] sm:$0xff]
        %v432 = vld [vmem:[#allocation5 + $0xd8] sm:$0xff]
        %v433 = vld [vmem:[#allocation5 + $0xe0] sm:$0xff]
        %v434 = vld [vmem:[#allocation5 + $0xe8] sm:$0xff]
        %v435 = vld [vmem:[#allocation5 + $0xf0] sm:$0xff]
        %v436 = vld [vmem:[#allocation5 + $0xf8] sm:$0xff]
        %v469 = vunpack.c.l.b16 %v405
        %v470 = vunpack.c.h.b16 %v405
        %v471 = vunpack.c.l.b16 %v406
        %v472 = vunpack.c.h.b16 %v406
        %v473 = vunpack.c.l.b16 %v407
        %v474 = vunpack.c.h.b16 %v407
        %v475 = vunpack.c.l.b16 %v408
        %v476 = vunpack.c.h.b16 %v408
        %v477 = vunpack.c.l.b16 %v409
        %v478 = vunpack.c.h.b16 %v409
        %v479 = vunpack.c.l.b16 %v410
        %v480 = vunpack.c.h.b16 %v410
        %v481 = vunpack.c.l.b16 %v411
        %v482 = vunpack.c.h.b16 %v411
        %v483 = vunpack.c.l.b16 %v412
        %v484 = vunpack.c.h.b16 %v412
        %v485 = vunpack.c.l.b16 %v413
        %v486 = vunpack.c.h.b16 %v413
        %v487 = vunpack.c.l.b16 %v414
        %v488 = vunpack.c.h.b16 %v414
        %v489 = vunpack.c.l.b16 %v415
        %v490 = vunpack.c.h.b16 %v415
        %v491 = vunpack.c.l.b16 %v416
        %v492 = vunpack.c.h.b16 %v416
        %v493 = vunpack.c.l.b16 %v417
        %v494 = vunpack.c.h.b16 %v417
        %v495 = vunpack.c.l.b16 %v418
        %v496 = vunpack.c.h.b16 %v418
        %v497 = vunpack.c.l.b16 %v419
        %v498 = vunpack.c.h.b16 %v419
        %v499 = vunpack.c.l.b16 %v420
        %v500 = vunpack.c.h.b16 %v420
        %v501 = vunpack.c.l.b16 %v421
        %v502 = vunpack.c.h.b16 %v421
        %v503 = vunpack.c.l.b16 %v422
        %v504 = vunpack.c.h.b16 %v422
        %v505 = vunpack.c.l.b16 %v423
        %v506 = vunpack.c.h.b16 %v423
        %v507 = vunpack.c.l.b16 %v424
        %v508 = vunpack.c.h.b16 %v424
        %v509 = vunpack.c.l.b16 %v425
        %v510 = vunpack.c.h.b16 %v425
        %v511 = vunpack.c.l.b16 %v426
        %v512 = vunpack.c.h.b16 %v426
        %v513 = vunpack.c.l.b16 %v427
        %v514 = vunpack.c.h.b16 %v427
        %v515 = vunpack.c.l.b16 %v428
        %v516 = vunpack.c.h.b16 %v428
        %v517 = vunpack.c.l.b16 %v429
        %v518 = vunpack.c.h.b16 %v429
        %v519 = vunpack.c.l.b16 %v430
        %v520 = vunpack.c.h.b16 %v430
        %v521 = vunpack.c.l.b16 %v431
        %v522 = vunpack.c.h.b16 %v431
        %v523 = vunpack.c.l.b16 %v432
        %v524 = vunpack.c.h.b16 %v432
        %v525 = vunpack.c.l.b16 %v433
        %v526 = vunpack.c.h.b16 %v433
        %v527 = vunpack.c.l.b16 %v434
        %v528 = vunpack.c.h.b16 %v434
        %v529 = vunpack.c.l.b16 %v435
        %v530 = vunpack.c.h.b16 %v435
        %v531 = vunpack.c.l.b16 %v436
        %v532 = vunpack.c.h.b16 %v436
        %v533 = vpack.c.b16 %v471, %v469
        %v534 = vpack.c.b16 %v472, %v470
        %v535 = vpack.c.b16 %v475, %v473
        %v536 = vpack.c.b16 %v476, %v474
        %v537 = vpack.c.b16 %v479, %v477
        %v538 = vpack.c.b16 %v480, %v478
        %v539 = vpack.c.b16 %v483, %v481
        %v540 = vpack.c.b16 %v484, %v482
        %v541 = vpack.c.b16 %v487, %v485
        %v542 = vpack.c.b16 %v488, %v486
        %v543 = vpack.c.b16 %v491, %v489
        %v544 = vpack.c.b16 %v492, %v490
        %v545 = vpack.c.b16 %v495, %v493
        %v546 = vpack.c.b16 %v496, %v494
        %v547 = vpack.c.b16 %v499, %v497
        %v548 = vpack.c.b16 %v500, %v498
        %v549 = vpack.c.b16 %v503, %v501
        %v550 = vpack.c.b16 %v504, %v502
        %v551 = vpack.c.b16 %v507, %v505
        %v552 = vpack.c.b16 %v508, %v506
        %v553 = vpack.c.b16 %v511, %v509
        %v554 = vpack.c.b16 %v512, %v510
        %v555 = vpack.c.b16 %v515, %v513
        %v556 = vpack.c.b16 %v516, %v514
        %v557 = vpack.c.b16 %v519, %v517
        %v558 = vpack.c.b16 %v520, %v518
        %v559 = vpack.c.b16 %v523, %v521
        %v560 = vpack.c.b16 %v524, %v522
        %v561 = vpack.c.b16 %v527, %v525
        %v562 = vpack.c.b16 %v528, %v526
        %v563 = vpack.c.b16 %v531, %v529
        %v564 = vpack.c.b16 %v532, %v530
        %597 = vmatprep.subr.bf16.mxu0 %v534
        %598 = vmatpush1.bf16.msra.mxu0 %v533
        %599 = vmatprep.subr.bf16.mxu0 %v536
        %600 = vmatpush1.bf16.msra.mxu0 %v535
        %601 = vmatprep.subr.bf16.mxu0 %v538
        %602 = vmatpush1.bf16.msra.mxu0 %v537
        %603 = vmatprep.subr.bf16.mxu0 %v540
        %604 = vmatpush1.bf16.msra.mxu0 %v539
        %605 = vmatprep.subr.bf16.mxu0 %v542
        %606 = vmatpush1.bf16.msra.mxu0 %v541
        %607 = vmatprep.subr.bf16.mxu0 %v544
        %608 = vmatpush1.bf16.msra.mxu0 %v543
        %609 = vmatprep.subr.bf16.mxu0 %v546
        %610 = vmatpush1.bf16.msra.mxu0 %v545
        %611 = vmatprep.subr.bf16.mxu0 %v548
        %612 = vmatpush1.bf16.msra.mxu0 %v547
        %613 = vmatprep.subr.bf16.mxu0 %v550
        %614 = vmatpush1.bf16.msra.mxu0 %v549
        %615 = vmatprep.subr.bf16.mxu0 %v552
        %616 = vmatpush1.bf16.msra.mxu0 %v551
        %617 = vmatprep.subr.bf16.mxu0 %v554
        %618 = vmatpush1.bf16.msra.mxu0 %v553
        %619 = vmatprep.subr.bf16.mxu0 %v556
        %620 = vmatpush1.bf16.msra.mxu0 %v555
        %621 = vmatprep.subr.bf16.mxu0 %v558
        %622 = vmatpush1.bf16.msra.mxu0 %v557
        %623 = vmatprep.subr.bf16.mxu0 %v560
        %624 = vmatpush1.bf16.msra.mxu0 %v559
        %625 = vmatprep.subr.bf16.mxu0 %v562
        %626 = vmatpush1.bf16.msra.mxu0 %v561
        %627 = vmatprep.subr.bf16.mxu0 %v564
        %628 = vmatpush1.bf16.msra.mxu0 %v563
        %629 = vmatprep.mubr.bf16.mxu0 %v404
        %630 = vmatmul.mubr.bf16.gmra.mrb[0].mxu0 %v403
        %v631 = vpop.f32.mrb[0].mxu0
        %v632 = vadd.f32 0.0, %v631
        %v633 = vpop.f32.mrb[0].mxu0
        %v634 = vadd.f32 0.0, %v633
        %v635 = vpop.f32.mrb[0].mxu0
        %v636 = vadd.f32 0.0, %v635
        %v637 = vpop.f32.mrb[0].mxu0
        %v638 = vadd.f32 0.0, %v637
        %639 = vdwg.mxu0
        %v640 = vld [vmem:[%s2] sm:$0x3]
        %v642 = vlaneseq
        %v643 = vshrl.u32 %v642, 7
        %v644 = vsub.s32 0, %v643
        %v645 = vrot.slane %v640, %v644
        %v646 = vlaneseq
        %v647 = vshrl.u32 %v646, 7
        %v648 = vsub.s32 1, %v647
        %v649 = vrot.slane %v640, %v648
        %v652 = vmul.f32 %v632, %v645
        %v653 = vmul.f32 %v634, %v649
        %v654 = vmul.f32 %v636, %v645
        %v655 = vmul.f32 %v638, %v649
        %v656 = vld [vmem:[%s3] sm:$0x3]
        %v658 = vlaneseq
        %v659 = vshrl.u32 %v658, 7
        %v660 = vsub.s32 0, %v659
        %v661 = vrot.slane %v656, %v660
        %v662 = vlaneseq
        %v663 = vshrl.u32 %v662, 7
        %v664 = vsub.s32 1, %v663
        %v665 = vrot.slane %v656, %v664
        %v668 = vadd.f32 %v652, %v661
        %v669 = vadd.f32 %v653, %v665
        %v670 = vadd.f32 %v654, %v661
        %v671 = vadd.f32 %v655, %v665
        %v672 = vmax.f32 %v668, 0.0
        %v673 = vmax.f32 %v669, 0.0
        %v674 = vmax.f32 %v670, 0.0
        %v675 = vmax.f32 %v671, 0.0
        %v676 = vpack.c.bf16 %v674, %v672
        %v677 = vpack.c.bf16 %v675, %v673
        %v678 = vld [vmem:[#allocation7] sm:$0xff]
        %v679 = vld [vmem:[#allocation7 + $0x8] sm:$0xff]
        %v680 = vld [vmem:[#allocation7 + $0x10] sm:$0xff]
        %v681 = vld [vmem:[#allocation7 + $0x18] sm:$0xff]
        %v682 = vld [vmem:[#allocation7 + $0x20] sm:$0xff]
        %v683 = vld [vmem:[#allocation7 + $0x28] sm:$0xff]
        %v684 = vld [vmem:[#allocation7 + $0x30] sm:$0xff]
        %v685 = vld [vmem:[#allocation7 + $0x38] sm:$0xff]
        %v686 = vld [vmem:[#allocation7 + $0x40] sm:$0xff]
        %v687 = vld [vmem:[#allocation7 + $0x48] sm:$0xff]
        %v688 = vld [vmem:[#allocation7 + $0x50] sm:$0xff]
        %v689 = vld [vmem:[#allocation7 + $0x58] sm:$0xff]
        %v690 = vld [vmem:[#allocation7 + $0x60] sm:$0xff]
        %v691 = vld [vmem:[#allocation7 + $0x68] sm:$0xff]
        %v692 = vld [vmem:[#allocation7 + $0x70] sm:$0xff]
        %v693 = vld [vmem:[#allocation7 + $0x78] sm:$0xff]
        %v694 = vld [vmem:[#allocation7 + $0x80] sm:$0xff]
        %v695 = vld [vmem:[#allocation7 + $0x88] sm:$0xff]
        %v696 = vld [vmem:[#allocation7 + $0x90] sm:$0xff]
        %v697 = vld [vmem:[#allocation7 + $0x98] sm:$0xff]
        %v698 = vld [vmem:[#allocation7 + $0xa0] sm:$0xff]
        %v699 = vld [vmem:[#allocation7 + $0xa8] sm:$0xff]
        %v700 = vld [vmem:[#allocation7 + $0xb0] sm:$0xff]
        %v701 = vld [vmem:[#allocation7 + $0xb8] sm:$0xff]
        %v702 = vld [vmem:[#allocation7 + $0xc0] sm:$0xff]
        %v703 = vld [vmem:[#allocation7 + $0xc8] sm:$0xff]
        %v704 = vld [vmem:[#allocation7 + $0xd0] sm:$0xff]
        %v705 = vld [vmem:[#allocation7 + $0xd8] sm:$0xff]
        %v706 = vld [vmem:[#allocation7 + $0xe0] sm:$0xff]
        %v707 = vld [vmem:[#allocation7 + $0xe8] sm:$0xff]
        %v708 = vld [vmem:[#allocation7 + $0xf0] sm:$0xff]
        %v709 = vld [vmem:[#allocation7 + $0xf8] sm:$0xff]
        %v742 = vunpack.c.l.b16 %v678
        %v743 = vunpack.c.h.b16 %v678
        %v744 = vunpack.c.l.b16 %v679
        %v745 = vunpack.c.h.b16 %v679
        %v746 = vunpack.c.l.b16 %v680
        %v747 = vunpack.c.h.b16 %v680
        %v748 = vunpack.c.l.b16 %v681
        %v749 = vunpack.c.h.b16 %v681
        %v750 = vunpack.c.l.b16 %v682
        %v751 = vunpack.c.h.b16 %v682
        %v752 = vunpack.c.l.b16 %v683
        %v753 = vunpack.c.h.b16 %v683
        %v754 = vunpack.c.l.b16 %v684
        %v755 = vunpack.c.h.b16 %v684
        %v756 = vunpack.c.l.b16 %v685
        %v757 = vunpack.c.h.b16 %v685
        %v758 = vunpack.c.l.b16 %v686
        %v759 = vunpack.c.h.b16 %v686
        %v760 = vunpack.c.l.b16 %v687
        %v761 = vunpack.c.h.b16 %v687
        %v762 = vunpack.c.l.b16 %v688
        %v763 = vunpack.c.h.b16 %v688
        %v764 = vunpack.c.l.b16 %v689
        %v765 = vunpack.c.h.b16 %v689
        %v766 = vunpack.c.l.b16 %v690
        %v767 = vunpack.c.h.b16 %v690
        %v768 = vunpack.c.l.b16 %v691
        %v769 = vunpack.c.h.b16 %v691
        %v770 = vunpack.c.l.b16 %v692
        %v771 = vunpack.c.h.b16 %v692
        %v772 = vunpack.c.l.b16 %v693
        %v773 = vunpack.c.h.b16 %v693
        %v774 = vunpack.c.l.b16 %v694
        %v775 = vunpack.c.h.b16 %v694
        %v776 = vunpack.c.l.b16 %v695
        %v777 = vunpack.c.h.b16 %v695
        %v778 = vunpack.c.l.b16 %v696
        %v779 = vunpack.c.h.b16 %v696
        %v780 = vunpack.c.l.b16 %v697
        %v781 = vunpack.c.h.b16 %v697
        %v782 = vunpack.c.l.b16 %v698
        %v783 = vunpack.c.h.b16 %v698
        %v784 = vunpack.c.l.b16 %v699
        %v785 = vunpack.c.h.b16 %v699
        %v786 = vunpack.c.l.b16 %v700
        %v787 = vunpack.c.h.b16 %v700
        %v788 = vunpack.c.l.b16 %v701
        %v789 = vunpack.c.h.b16 %v701
        %v790 = vunpack.c.l.b16 %v702
        %v791 = vunpack.c.h.b16 %v702
        %v792 = vunpack.c.l.b16 %v703
        %v793 = vunpack.c.h.b16 %v703
        %v794 = vunpack.c.l.b16 %v704
        %v795 = vunpack.c.h.b16 %v704
        %v796 = vunpack.c.l.b16 %v705
        %v797 = vunpack.c.h.b16 %v705
        %v798 = vunpack.c.l.b16 %v706
        %v799 = vunpack.c.h.b16 %v706
        %v800 = vunpack.c.l.b16 %v707
        %v801 = vunpack.c.h.b16 %v707
        %v802 = vunpack.c.l.b16 %v708
        %v803 = vunpack.c.h.b16 %v708
        %v804 = vunpack.c.l.b16 %v709
        %v805 = vunpack.c.h.b16 %v709
        %v806 = vpack.c.b16 %v744, %v742
        %v807 = vpack.c.b16 %v745, %v743
        %v808 = vpack.c.b16 %v748, %v746
        %v809 = vpack.c.b16 %v749, %v747
        %v810 = vpack.c.b16 %v752, %v750
        %v811 = vpack.c.b16 %v753, %v751
        %v812 = vpack.c.b16 %v756, %v754
        %v813 = vpack.c.b16 %v757, %v755
        %v814 = vpack.c.b16 %v760, %v758
        %v815 = vpack.c.b16 %v761, %v759
        %v816 = vpack.c.b16 %v764, %v762
        %v817 = vpack.c.b16 %v765, %v763
        %v818 = vpack.c.b16 %v768, %v766
        %v819 = vpack.c.b16 %v769, %v767
        %v820 = vpack.c.b16 %v772, %v770
        %v821 = vpack.c.b16 %v773, %v771
        %v822 = vpack.c.b16 %v776, %v774
        %v823 = vpack.c.b16 %v777, %v775
        %v824 = vpack.c.b16 %v780, %v778
        %v825 = vpack.c.b16 %v781, %v779
        %v826 = vpack.c.b16 %v784, %v782
        %v827 = vpack.c.b16 %v785, %v783
        %v828 = vpack.c.b16 %v788, %v786
        %v829 = vpack.c.b16 %v789, %v787
        %v830 = vpack.c.b16 %v792, %v790
        %v831 = vpack.c.b16 %v793, %v791
        %v832 = vpack.c.b16 %v796, %v794
        %v833 = vpack.c.b16 %v797, %v795
        %v834 = vpack.c.b16 %v800, %v798
        %v835 = vpack.c.b16 %v801, %v799
        %v836 = vpack.c.b16 %v804, %v802
        %v837 = vpack.c.b16 %v805, %v803
        %870 = vmatprep.subr.bf16.mxu0 %v807
        %871 = vmatpush1.bf16.msra.mxu0 %v806
        %872 = vmatprep.subr.bf16.mxu0 %v809
        %873 = vmatpush1.bf16.msra.mxu0 %v808
        %874 = vmatprep.subr.bf16.mxu0 %v811
        %875 = vmatpush1.bf16.msra.mxu0 %v810
        %876 = vmatprep.subr.bf16.mxu0 %v813
        %877 = vmatpush1.bf16.msra.mxu0 %v812
        %878 = vmatprep.subr.bf16.mxu0 %v815
        %879 = vmatpush1.bf16.msra.mxu0 %v814
        %880 = vmatprep.subr.bf16.mxu0 %v817
        %881 = vmatpush1.bf16.msra.mxu0 %v816
        %882 = vmatprep.subr.bf16.mxu0 %v819
        %883 = vmatpush1.bf16.msra.mxu0 %v818
        %884 = vmatprep.subr.bf16.mxu0 %v821
        %885 = vmatpush1.bf16.msra.mxu0 %v820
        %886 = vmatprep.subr.bf16.mxu0 %v823
        %887 = vmatpush1.bf16.msra.mxu0 %v822
        %888 = vmatprep.subr.bf16.mxu0 %v825
        %889 = vmatpush1.bf16.msra.mxu0 %v824
        %890 = vmatprep.subr.bf16.mxu0 %v827
        %891 = vmatpush1.bf16.msra.mxu0 %v826
        %892 = vmatprep.subr.bf16.mxu0 %v829
        %893 = vmatpush1.bf16.msra.mxu0 %v828
        %894 = vmatprep.subr.bf16.mxu0 %v831
        %895 = vmatpush1.bf16.msra.mxu0 %v830
        %896 = vmatprep.subr.bf16.mxu0 %v833
        %897 = vmatpush1.bf16.msra.mxu0 %v832
        %898 = vmatprep.subr.bf16.mxu0 %v835
        %899 = vmatpush1.bf16.msra.mxu0 %v834
        %900 = vmatprep.subr.bf16.mxu0 %v837
        %901 = vmatpush1.bf16.msra.mxu0 %v836
        %902 = vmatprep.mubr.bf16.mxu0 %v677
        %903 = vmatmul.mubr.bf16.gmra.mrb[0].mxu0 %v676
        %v904 = vpop.f32.mrb[0].mxu0
        %v905 = vadd.f32 0.0, %v904
        %v906 = vpop.f32.mrb[0].mxu0
        %v907 = vadd.f32 0.0, %v906
        %v908 = vpop.f32.mrb[0].mxu0
        %v909 = vadd.f32 0.0, %v908
        %v910 = vpop.f32.mrb[0].mxu0
        %v911 = vadd.f32 0.0, %v910
        %912 = vdwg.mxu0
        %v913 = vld [vmem:[%s5] sm:$0x3]
        %v915 = vlaneseq
        %v916 = vshrl.u32 %v915, 7
        %v917 = vsub.s32 0, %v916
        %v918 = vrot.slane %v913, %v917
        %v919 = vlaneseq
        %v920 = vshrl.u32 %v919, 7
        %v921 = vsub.s32 1, %v920
        %v922 = vrot.slane %v913, %v921
        %v925 = vmul.f32 %v905, %v918
        %v926 = vmul.f32 %v907, %v922
        %v927 = vmul.f32 %v909, %v918
        %v928 = vmul.f32 %v911, %v922
        %v929 = vld [vmem:[%s6] sm:$0x3]
        %v931 = vlaneseq
        %v932 = vshrl.u32 %v931, 7
        %v933 = vsub.s32 0, %v932
        %v934 = vrot.slane %v929, %v933
        %v935 = vlaneseq
        %v936 = vshrl.u32 %v935, 7
        %v937 = vsub.s32 1, %v936
        %v938 = vrot.slane %v929, %v937
        %v941 = vadd.f32 %v925, %v934
        %v942 = vadd.f32 %v926, %v938
        %v943 = vadd.f32 %v927, %v934
        %v944 = vadd.f32 %v928, %v938
        %v945 = vmax.f32 %v941, 0.0
        %v946 = vmax.f32 %v942, 0.0
        %v947 = vmax.f32 %v943, 0.0
        %v948 = vmax.f32 %v944, 0.0
        %v949 = vpack.c.bf16 %v947, %v945
        %v950 = vpack.c.bf16 %v948, %v946
        %v951 = vld [vmem:[#allocation8] sm:$0xf]
        %v952 = vld [vmem:[#allocation8 + $0x4] sm:$0xf]
        %v953 = vld [vmem:[#allocation8 + $0x8] sm:$0xf]
        %v954 = vld [vmem:[#allocation8 + $0xc] sm:$0xf]
        %v955 = vld [vmem:[#allocation8 + $0x10] sm:$0xf]
        %v956 = vld [vmem:[#allocation8 + $0x14] sm:$0xf]
        %v957 = vld [vmem:[#allocation8 + $0x18] sm:$0xf]
        %v958 = vld [vmem:[#allocation8 + $0x1c] sm:$0xf]
        %v959 = vld [vmem:[#allocation8 + $0x20] sm:$0xf]
        %v960 = vld [vmem:[#allocation8 + $0x24] sm:$0xf]
        %v961 = vld [vmem:[#allocation8 + $0x28] sm:$0xf]
        %v962 = vld [vmem:[#allocation8 + $0x2c] sm:$0xf]
        %v963 = vld [vmem:[#allocation8 + $0x30] sm:$0xf]
        %v964 = vld [vmem:[#allocation8 + $0x34] sm:$0xf]
        %v965 = vld [vmem:[#allocation8 + $0x38] sm:$0xf]
        %v966 = vld [vmem:[#allocation8 + $0x3c] sm:$0xf]
        %v967 = vld [vmem:[#allocation8 + $0x40] sm:$0xf]
        %v968 = vld [vmem:[#allocation8 + $0x44] sm:$0xf]
        %v969 = vld [vmem:[#allocation8 + $0x48] sm:$0xf]
        %v970 = vld [vmem:[#allocation8 + $0x4c] sm:$0xf]
        %v971 = vld [vmem:[#allocation8 + $0x50] sm:$0xf]
        %v972 = vld [vmem:[#allocation8 + $0x54] sm:$0xf]
        %v973 = vld [vmem:[#allocation8 + $0x58] sm:$0xf]
        %v974 = vld [vmem:[#allocation8 + $0x5c] sm:$0xf]
        %v975 = vld [vmem:[#allocation8 + $0x60] sm:$0xf]
        %v976 = vld [vmem:[#allocation8 + $0x64] sm:$0xf]
        %v977 = vld [vmem:[#allocation8 + $0x68] sm:$0xf]
        %v978 = vld [vmem:[#allocation8 + $0x6c] sm:$0xf]
        %v979 = vld [vmem:[#allocation8 + $0x70] sm:$0xf]
        %v980 = vld [vmem:[#allocation8 + $0x74] sm:$0xf]
        %v981 = vld [vmem:[#allocation8 + $0x78] sm:$0xf]
        %v982 = vld [vmem:[#allocation8 + $0x7c] sm:$0xf]
        %v983 = vld [vmem:[%s8] sm:$0x1]
        %v985 = vlaneseq
        %v986 = vshrl.u32 %v985, 7
        %v987 = vsub.s32 0, %v986
        %v988 = vrot.slane %v983, %v987
        %v1022 = vunpack.c.l.b16 %v951
        %v1023 = vunpack.c.l.b16 %v952
        %v1024 = vunpack.c.l.b16 %v953
        %v1025 = vunpack.c.l.b16 %v954
        %v1026 = vunpack.c.l.b16 %v955
        %v1027 = vunpack.c.l.b16 %v956
        %v1028 = vunpack.c.l.b16 %v957
        %v1029 = vunpack.c.l.b16 %v958
        %v1030 = vunpack.c.l.b16 %v959
        %v1031 = vunpack.c.l.b16 %v960
        %v1032 = vunpack.c.l.b16 %v961
        %v1033 = vunpack.c.l.b16 %v962
        %v1034 = vunpack.c.l.b16 %v963
        %v1035 = vunpack.c.l.b16 %v964
        %v1036 = vunpack.c.l.b16 %v965
        %v1037 = vunpack.c.l.b16 %v966
        %v1038 = vunpack.c.l.b16 %v967
        %v1039 = vunpack.c.l.b16 %v968
        %v1040 = vunpack.c.l.b16 %v969
        %v1041 = vunpack.c.l.b16 %v970
        %v1042 = vunpack.c.l.b16 %v971
        %v1043 = vunpack.c.l.b16 %v972
        %v1044 = vunpack.c.l.b16 %v973
        %v1045 = vunpack.c.l.b16 %v974
        %v1046 = vunpack.c.l.b16 %v975
        %v1047 = vunpack.c.l.b16 %v976
        %v1048 = vunpack.c.l.b16 %v977
        %v1049 = vunpack.c.l.b16 %v978
        %v1050 = vunpack.c.l.b16 %v979
        %v1051 = vunpack.c.l.b16 %v980
        %v1052 = vunpack.c.l.b16 %v981
        %v1053 = vunpack.c.l.b16 %v982
        %v1054 = vpack.c.b16 %v1023, %v1022
        %v1055 = vpack.c.b16 %v1025, %v1024
        %v1056 = vpack.c.b16 %v1027, %v1026
        %v1057 = vpack.c.b16 %v1029, %v1028
        %v1058 = vpack.c.b16 %v1031, %v1030
        %v1059 = vpack.c.b16 %v1033, %v1032
        %v1060 = vpack.c.b16 %v1035, %v1034
        %v1061 = vpack.c.b16 %v1037, %v1036
        %v1062 = vpack.c.b16 %v1039, %v1038
        %v1063 = vpack.c.b16 %v1041, %v1040
        %v1064 = vpack.c.b16 %v1043, %v1042
        %v1065 = vpack.c.b16 %v1045, %v1044
        %v1066 = vpack.c.b16 %v1047, %v1046
        %v1067 = vpack.c.b16 %v1049, %v1048
        %v1068 = vpack.c.b16 %v1051, %v1050
        %v1069 = vpack.c.b16 %v1053, %v1052
        %1086 = vmatprep.subr.bf16.mxu0 0
        %1087 = vmatpush1.bf16.msra.mxu0 %v1054
        %1088 = vmatprep.subr.bf16.mxu0 0
        %1089 = vmatpush1.bf16.msra.mxu0 %v1055
        %1090 = vmatprep.subr.bf16.mxu0 0
        %1091 = vmatpush1.bf16.msra.mxu0 %v1056
        %1092 = vmatprep.subr.bf16.mxu0 0
        %1093 = vmatpush1.bf16.msra.mxu0 %v1057
        %1094 = vmatprep.subr.bf16.mxu0 0
        %1095 = vmatpush1.bf16.msra.mxu0 %v1058
        %1096 = vmatprep.subr.bf16.mxu0 0
        %1097 = vmatpush1.bf16.msra.mxu0 %v1059
        %1098 = vmatprep.subr.bf16.mxu0 0
        %1099 = vmatpush1.bf16.msra.mxu0 %v1060
        %1100 = vmatprep.subr.bf16.mxu0 0
        %1101 = vmatpush1.bf16.msra.mxu0 %v1061
        %1102 = vmatprep.subr.bf16.mxu0 0
        %1103 = vmatpush1.bf16.msra.mxu0 %v1062
        %1104 = vmatprep.subr.bf16.mxu0 0
        %1105 = vmatpush1.bf16.msra.mxu0 %v1063
        %1106 = vmatprep.subr.bf16.mxu0 0
        %1107 = vmatpush1.bf16.msra.mxu0 %v1064
        %1108 = vmatprep.subr.bf16.mxu0 0
        %1109 = vmatpush1.bf16.msra.mxu0 %v1065
        %1110 = vmatprep.subr.bf16.mxu0 0
        %1111 = vmatpush1.bf16.msra.mxu0 %v1066
        %1112 = vmatprep.subr.bf16.mxu0 0
        %1113 = vmatpush1.bf16.msra.mxu0 %v1067
        %1114 = vmatprep.subr.bf16.mxu0 0
        %1115 = vmatpush1.bf16.msra.mxu0 %v1068
        %1116 = vmatprep.subr.bf16.mxu0 0
        %1117 = vmatpush1.bf16.msra.mxu0 %v1069
        %1118 = vmatprep.mubr.bf16.mxu0 %v950
        %1119 = vmatmul.mubr.bf16.gmra.mrb[0].mxu0 %v949
        %v1120 = vpop.f32.mrb[0].mxu0
        %v1121 = vadd.f32 %v988, %v1120
        %v1122 = vpop.f32.mrb[0].mxu0
        %v1123 = vpop.f32.mrb[0].mxu0
        %v1124 = vadd.f32 %v988, %v1123
        %v1125 = vpop.f32.mrb[0].mxu0
        %1126 = vdwg.mxu0
        %v1127 = vsub.f32 0.0, %v1121
        %v1128 = vsub.f32 0.0, %v1124
        %v1129 = vmul.f32 %v1127, 1.442695
        %v1130 = vpow.pop %v1129
        %v1131 = vmul.f32 %v1128, 1.442695
        %v1132 = vpow.pop %v1131
        %v1133 = vadd.f32 %v1130, 1.0
        %v1134 = vadd.f32 %v1132, 1.0
        %v1135 = vrcp.pop %v1133
        %v1136 = vrcp.pop %v1134
        %v1137 = vlaneseq
        %v1138 = vand.u32 %v1137, 127
        %vm1139 = vcmp.eq.s32.totalorder %v1138, 0
        %v1140 = vsel %vm1139, %v1135, %v1121
        %v1141 = vsel %vm1139, %v1136, %v1124
        %1142 = vst [vmem:[%s395] sm:$0xff] %v1140
        %1143 = vst [vmem:[%s395 + $0x8] sm:$0xff] %v1141
        %s1144 = sand.u32 %s230, 1
        %s1145 = scalar_lea.sflag [#allocation4], %s1144
        %s1146 = sand.u32 %s230, 1
        %s1147 = smul.addr %s1146, 16
        %s1148 = scalar_lea.vmem [#allocation10], %s1147
        // Predicated region
        $region73: #{tpu_custom_call.1} parent=55 // pred_check
          %p1149 = pneg %p240
        $region74: #{tpu_custom_call.1} parent=55 // pred_check_branch
          %1151 = sbr.rel (%p1149) target = $region76
        $region75: #{tpu_custom_call.1} parent=55 // pred_region
          %s1152 = smul.u32 2, %s28
          %s1154 = ssub.s32 256, 256
          %1155 = vsyncadd %s1145, %s1154
          %s1156 = smul.addr %s1152, 128
          %s1157 = scalar_lea.hbm %s9, %s1156
          %s1158 = sshll.u32 %s1148, 4
          %s1159 = int_to_ptr.vmem [resolvable:$true] %s1158
          %1164 = dma.vmem_to_hbm [thread:$0]  %s1159, 256, %s1157, %s1145, 128, 128, 8
        $region76: #{tpu_custom_call.1} parent=55 // pred_fallthru
          _
      $region56: #{tpu_custom_call.1} parent=5 // pred_fallthru
        _
      %p1165 = scmp.le.s32.totalorder 2, %s23
      // Predicated region
      $region77: #{tpu_custom_call.1} parent=5 // pred_check
        %p1166 = pneg %p1165
      $region78: #{tpu_custom_call.1} parent=5 // pred_check_branch
        %1168 = sbr.rel (%p1166) target = $region80
      $region79: #{tpu_custom_call.1} parent=5 // pred_region
        %s1169 = ssub.s32 %s23, 2
        // Predicated region
        $region81: #{tpu_custom_call.1} parent=79 // pred_check
          %p1170 = pneg %p246
        $region82: #{tpu_custom_call.1} parent=79 // pred_check_branch
          %1172 = sbr.rel (%p1170) target = $region84
        $region83: #{tpu_custom_call.1} parent=79 // pred_region
          %s1173 = sand.u32 %s231, 1
          %s1174 = scalar_lea.sflag [#allocation4], %s1173
          %s1175 = sand.u32 %s231, 1
          %s1176 = smul.addr %s1175, 16
          %s1177 = scalar_lea.vmem [#allocation10], %s1176
          %1178 = dma.done %s1174, 256
        $region84: #{tpu_custom_call.1} parent=79 // pred_fallthru
          _
      $region80: #{tpu_custom_call.1} parent=5 // pred_fallthru
        _
    $region6: #{tpu_custom_call.1} parent=1 // loop_footer
      %s27 = sadd.s32 1, %s23
    $region7: #{tpu_custom_call.1} parent=1 // loop_footer_branch
      %22 = sbr.rel target = $region3
    $region8: #{tpu_custom_call.1} parent=1 // loop_exit
      _
    %1179 = vsyncpa [#allocation3], 1
    %s1180 = scalar_lea.sflag [#allocation3], 1
    %1181 = vsyncpa %s1180, 1
    %1182 = vsyncpa [#allocation6], 1
    %1183 = vsyncpa [#allocation9], 1
    %1184 = vsyncpa [#allocation4], 1
    %s1185 = scalar_lea.sflag [#allocation4], 1
    %1186 = vsyncpa %s1185, 1

</llo_original>
